<compile_context>
chip_gen: v5e
topology: v5e:2x2
jax: 0.10.0
libtpu: 0.0.40
codegen_flags: <defaults>
</compile_context>

<pallas_src>
import functools

import numpy as np

import jax
import jax.numpy as jnp
from jax import lax
from jax.experimental import pallas as pl
from jax.experimental.pallas import tpu as pltpu


def _round_up(x, m):
    return (x + m - 1) // m * m


# ------------------------------------------------------------------
# Kernel 1: row-parallel contrastive partial sums
# ------------------------------------------------------------------
def _w2v2_contrastive_kernel(targets_ref, labels_ref, negs_ref, out_ref, *,
                             n_valid, k_negs, d_pad, inv_temp, unroll_k=16):
    i = pl.program_id(0)
    tn = targets_ref.shape[0]

    t = targets_ref[...].astype(jnp.float32)                      # (TN, Dp)
    t2 = jnp.sum(t * t, axis=-1, keepdims=True)                   # (TN, 1)
    # rsqrt lowers to the EUP slot (overlaps VPU work); fold 1/temperature in.
    t_scale = lax.rsqrt(jnp.maximum(t2, 1e-12)) * inv_temp        # (TN, 1)

    def score(cand):
        c = cand.astype(jnp.float32)
        dot = jnp.sum(t * c, axis=-1, keepdims=True)              # (TN, 1)
        c2 = jnp.sum(c * c, axis=-1, keepdims=True)                # (TN, 1)
        return dot * t_scale * lax.rsqrt(jnp.maximum(c2, 1e-12))   # cos/T

    # Positive candidate (the label itself).  Shifting the log-sum-exp by it keeps
    # exp() bounded (exponent <= 2/T) even for small temperatures.
    pos = score(labels_ref[...])                                   # (TN, 1)
    one = jnp.ones_like(pos)                                       # exp(pos - pos)

    if k_negs <= unroll_k:
        sum_exp = one
        for k in range(k_negs):                                    # lane-aligned slabs
            s_k = score(negs_ref[:, k * d_pad:(k + 1) * d_pad])
            sum_exp = sum_exp + jnp.exp(s_k - pos)
    else:
        # Production-sized K: rolled loop over 128-aligned dynamic slabs.
        def body(k, acc):
            off = pl.multiple_of(k * d_pad, 128)
            s_k = score(negs_ref[:, pl.ds(off, d_pad)])
            return acc + jnp.exp(s_k - pos)
        sum_exp = lax.fori_loop(0, k_negs, body, one)

    # -log(exp(pos) / sum_k exp(s_k)) == log(sum_k exp(s_k - pos))
    per_row = jnp.log(sum_exp)                                     # (TN, 1)

    # Mask the ragged last tile (no padded rows are streamed from HBM).
    row_ids = i * tn + lax.broadcasted_iota(jnp.int32, (tn, 1), 0)
    per_row = jnp.where(row_ids < n_valid, per_row, 0.0)
    partial = jnp.sum(per_row)                                     # scalar

    # Lane-dense (1, 8, 128) output slab: partial at [0,0,0], zeros elsewhere.
    sub = lax.broadcasted_iota(jnp.int32, (1, 8, 128), 1)
    lane = lax.broadcasted_iota(jnp.int32, (1, 8, 128), 2)
    out_ref[...] = jnp.where((sub == 0) & (lane == 0), partial, 0.0)


# ------------------------------------------------------------------
# Kernel 2: 1-step finalize (contrastive mean + diversity + combine)
# ------------------------------------------------------------------
def _w2v2_finalize_kernel(partials_ref, perp_ref, out_ref, *, n_valid, g, v, alpha):
    contrastive = jnp.sum(partials_ref[...]) * (1.0 / n_valid)     # scalar
    p = perp_ref[...]                                              # zero-padded (Gp, Vp)
    ent = jnp.sum(p * jnp.log(jnp.maximum(p, 1e-9)))               # padded zeros add 0
    loss = contrastive + alpha * ent * (1.0 / (g * v))
    out_ref[...] = jnp.full((1, 1), loss, dtype=jnp.float32)


# ------------------------------------------------------------------
# Wrapper
# ------------------------------------------------------------------
def wav2vec2_loss_pallas(targets, labels, negatives, perplexity, *, temperature, alpha,
                         max_row_tile=1024, vmem_budget_bytes=32 * 1024 * 1024):
    """targets: (N, D), labels: (N, D), negatives: (N, K, D), perplexity: (G, V).
    Returns scalar f32 loss. Inputs stream in their native dtype (f32 / bf16)."""
    N, D = targets.shape
    K = negatives.shape[1]
    G, V = perplexity.shape

    in_dtype = targets.dtype
    labels = labels.astype(in_dtype)
    negatives = negatives.astype(in_dtype)
    itemsize = jnp.dtype(in_dtype).itemsize
    sub = 8 * max(1, 4 // itemsize)            # 8 for f32, 16 for bf16, 32 for int8

    # Pad the feature dim only if needed (real wav2vec2 D is already 128-aligned).
    d_pad = _round_up(D, 128)
    if d_pad != D:
        tpad = jnp.zeros((N, d_pad), in_dtype).at[:, :D].set(targets)
        lpad = jnp.zeros((N, d_pad), in_dtype).at[:, :D].set(labels)
        npad = jnp.zeros((N, K, d_pad), in_dtype).at[:, :, :D].set(negatives)
    else:
        tpad, lpad, npad = targets, labels, negatives
    negs_flat = npad.reshape(N, K * d_pad)     # lane-aligned candidate slabs

    # Row tile from the VMEM budget: 2 pipeline buffers x (K+2) feature slabs per row.
    bytes_per_row = 2 * (K + 2) * d_pad * itemsize
    tn = vmem_budget_bytes // bytes_per_row
    tn = max(sub, min(max_row_tile, tn))
    tn = (tn // sub) * sub
    tn = min(tn, _round_up(N, sub))
    num_tiles = pl.cdiv(N, tn)

    footprint = bytes_per_row * tn
    vmem_limit = int(min(footprint + (16 << 20), 60 << 20))

    contrastive_kernel = functools.partial(
        _w2v2_contrastive_kernel,
        n_valid=N, k_negs=K, d_pad=d_pad, inv_temp=1.0 / float(temperature))

    partials = pl.pallas_call(
        contrastive_kernel,
        out_shape=jax.ShapeDtypeStruct((num_tiles, 8, 128), jnp.float32),
        grid=(num_tiles,),
        in_specs=[
            pl.BlockSpec((tn, d_pad), lambda i: (i, 0)),
            pl.BlockSpec((tn, d_pad), lambda i: (i, 0)),
            pl.BlockSpec((tn, K * d_pad), lambda i: (i, 0)),
        ],
        out_specs=pl.BlockSpec((1, 8, 128), lambda i: (i, 0, 0)),
        compiler_params=pltpu.CompilerParams(
            dimension_semantics=("parallel",),
            vmem_limit_bytes=vmem_limit),
    )(tpad, lpad, negs_flat)

    # Tiny (8, 128)-padded perplexity block (zero rows/cols contribute exactly 0).
    g_pad, v_pad = _round_up(G, 8), _round_up(V, 128)
    perp_f32 = perplexity.astype(jnp.float32)
    if (g_pad, v_pad) != (G, V):
        perp_p = jnp.zeros((g_pad, v_pad), jnp.float32).at[:G, :V].set(perp_f32)
    else:
        perp_p = perp_f32

    finalize_kernel = functools.partial(
        _w2v2_finalize_kernel, n_valid=N, g=G, v=V, alpha=float(alpha))

    out = pl.pallas_call(
        finalize_kernel,
        out_shape=jax.ShapeDtypeStruct((1, 1), jnp.float32),
        grid=(1,),
        in_specs=[
            pl.BlockSpec((num_tiles, 8, 128), lambda i: (0, 0, 0)),
            pl.BlockSpec((g_pad, v_pad), lambda i: (0, 0)),
        ],
        out_specs=pl.BlockSpec((1, 1), lambda i: (0, 0)),
    )(partials, perp_p)

    return out[0, 0]


# ------------------------------------------------------------------
# Host-side glue: boolean-mask selection + negative sampler
# ------------------------------------------------------------------
# TODO(synk): the boolean-mask gather and per-batch `random.sample` sampler have
# data-dependent shapes / host RNG; they are resolved to static gather indices here.
def prepare_contrastive_inputs(encoder_out, quantized_features, time_mask_indices,
                               num_negatives, sample_seed=0):
    mask = np.asarray(time_mask_indices).astype(bool)
    B, T = mask.shape
    D = encoder_out.shape[-1]
    K = num_negatives

    flat_idx = np.nonzero(mask.reshape(-1))[0].astype(np.int32)    # (N,)
    N = int(flat_idx.shape[0])
    num_targets_per_batch = [int(mask[b].sum()) for b in range(B)]

    # Same semantics as the torch negative_sampler: for each target, K distinct
    # negatives drawn from the *other* masked targets of the same batch.
    rng = np.random.RandomState(sample_seed)
    neg_idx = np.empty((N, K), dtype=np.int32)
    start = 0
    for nb in num_targets_per_batch:
        assert nb > K, "each batch needs more than K masked targets"
        for i in range(nb):
            cand = np.concatenate([np.arange(i), np.arange(i + 1, nb)])
            sel = rng.choice(nb - 1, size=K, replace=False)
            neg_idx[start + i] = start + cand[sel]
        start += nb

    enc_flat = encoder_out.reshape(B * T, D)
    q_flat = quantized_features.reshape(B * T, D)
    targets = jnp.take(enc_flat, flat_idx, axis=0)                 # (N, D)
    labels = jnp.take(q_flat, flat_idx, axis=0)                    # (N, D)
    negs = jnp.take(labels, neg_idx.reshape(-1), axis=0).reshape(N, K, D)
    return targets, labels, negs


# ------------------------------------------------------------------
# Pure-JAX reference (mirrors the PyTorch module) for validation
# ------------------------------------------------------------------
def _reference_loss(targets, labels, negatives, perplexity, temperature, alpha):
    eps = 1e-8
    samples = jnp.concatenate([labels[:, None, :], negatives], axis=1)   # (N, K+1, D)
    t_n = jnp.linalg.norm(targets, axis=-1)                              # (N,)
    s_n = jnp.linalg.norm(samples, axis=-1)                              # (N, K+1)
    dots = jnp.einsum('nd,nkd->nk', targets, samples)
    cos = dots / jnp.maximum(t_n[:, None] * s_n, eps)
    sim = jnp.exp(cos / temperature)
    contrastive = jnp.mean(-jnp.log(sim[:, 0] / jnp.sum(sim, axis=1)))
    logp = jnp.log(jnp.maximum(perplexity, 1e-9))
    diversity = jnp.sum(perplexity * logp) / (perplexity.shape[0] * perplexity.shape[1])
    return contrastive + alpha * diversity


# ------------------------------------------------------------------
if __name__ == "__main__":
    # Loss hyper-parameters (cfg.loss.*)
    temperature = 0.1        # contrastive_loss_temperature
    K = 4                    # num_contrastive_loss_negative_samples
    G, V = 2, 16             # num_code_vector_groups, num_code_vectors_per_group
    alpha = 0.1              # loss_alpha

    # Small deterministic inputs
    B, T, D = 2, 16, 32
    key = jax.random.PRNGKey(0)
    k1, k2, k3 = jax.random.split(key, 3)
    encoder_out = jax.random.normal(k1, (B, T, D), jnp.float32)
    quantized_features = jax.random.normal(k2, (B, T, D), jnp.float32)
    perplexity = jax.nn.softmax(jax.random.normal(k3, (G, V), jnp.float32), axis=-1)

    # Deterministic time mask: 6 masked steps per batch row (> K, as torch requires)
    mask_np = np.zeros((B, T), dtype=bool)
    mask_np[0, [1, 3, 5, 8, 11, 14]] = True
    mask_np[1, [0, 2, 6, 9, 12, 15]] = True

    targets, labels, negs = prepare_contrastive_inputs(
        encoder_out, quantized_features, mask_np, K, sample_seed=0)

    # ---- f32 (native dtype) path ----
    loss = wav2vec2_loss_pallas(targets, labels, negs, perplexity,
                                temperature=temperature, alpha=alpha)
    loss = jax.block_until_ready(loss)
    ref = _reference_loss(targets, labels, negs, perplexity, temperature, alpha)

    assert loss.shape == (), loss.shape
    assert loss.dtype == jnp.float32
    assert bool(jnp.isfinite(loss))
    assert bool(jnp.allclose(loss, ref, rtol=1e-4, atol=1e-4)), (float(loss), float(ref))

    # ---- bf16 streaming path (native-dtype inputs, upcast to f32 inside kernel) ----
    t_bf = targets.astype(jnp.bfloat16)
    l_bf = labels.astype(jnp.bfloat16)
    n_bf = negs.astype(jnp.bfloat16)
    loss_bf = wav2vec2_loss_pallas(t_bf, l_bf, n_bf, perplexity,
                                   temperature=temperature, alpha=alpha)
    loss_bf = jax.block_until_ready(loss_bf)
    ref_bf = _reference_loss(t_bf.astype(jnp.float32), l_bf.astype(jnp.float32),
                             n_bf.astype(jnp.float32), perplexity, temperature, alpha)
    assert bool(jnp.isfinite(loss_bf))
    assert bool(jnp.allclose(loss_bf, ref_bf, rtol=1e-3, atol=1e-3)), (
        float(loss_bf), float(ref_bf))

    print("KERNEL_OK")
</pallas_src>

<mosaic_0001>
module attributes {stable_mosaic.version = 11 : i64} {
  func.func @_w2v2_contrastive_kernel(%arg0: i32, %arg1: memref<16x128xf32, #tpu.memory_space<vmem>>, %arg2: memref<16x128xf32, #tpu.memory_space<vmem>>, %arg3: memref<16x512xf32, #tpu.memory_space<vmem>>, %arg4: memref<1x8x128xf32, #tpu.memory_space<vmem>>) attributes {dimension_semantics = [#tpu.dimension_semantics<parallel>], iteration_bounds = array<i64: 1>, scalar_prefetch = 0 : i64, scratch_operands = 0 : i64, tpu.core_type = #tpu.core_type<tc>, window_params = [{transform_indices = @transform_0, window_bounds = array<i64: 16, 128>}, {transform_indices = @transform_1, window_bounds = array<i64: 16, 128>}, {transform_indices = @transform_2, window_bounds = array<i64: 16, 512>}, {transform_indices = @transform_3, window_bounds = array<i64: 1, 8, 128>}]} {
    %c0 = arith.constant 0 : index
    %c0_0 = arith.constant 0 : index
    %0 = vector.load %arg1[%c0, %c0_0] : memref<16x128xf32, #tpu.memory_space<vmem>>, vector<16x128xf32>
    %1 = arith.mulf %0, %0 : vector<16x128xf32>
    %cst = arith.constant dense<0.000000e+00> : vector<16xf32>
    %2 = vector.multi_reduction <add>, %1, %cst [1] : vector<16x128xf32> to vector<16xf32>
    %3 = vector.shape_cast %2 : vector<16xf32> to vector<16x1xf32>
    %cst_1 = arith.constant 9.99999996E-13 : f32
    %4 = vector.broadcast %cst_1 : f32 to vector<16x1xf32>
    %5 = arith.maximumf %3, %4 : vector<16x1xf32>
    %6 = math.rsqrt %5 : vector<16x1xf32>
    %cst_2 = arith.constant 1.000000e+01 : f32
    %7 = vector.broadcast %cst_2 : f32 to vector<16x1xf32>
    %8 = arith.mulf %6, %7 : vector<16x1xf32>
    %c0_3 = arith.constant 0 : index
    %c0_4 = arith.constant 0 : index
    %9 = vector.load %arg2[%c0_3, %c0_4] : memref<16x128xf32, #tpu.memory_space<vmem>>, vector<16x128xf32>
    %10 = arith.mulf %0, %9 : vector<16x128xf32>
    %cst_5 = arith.constant dense<0.000000e+00> : vector<16xf32>
    %11 = vector.multi_reduction <add>, %10, %cst_5 [1] : vector<16x128xf32> to vector<16xf32>
    %12 = vector.shape_cast %11 : vector<16xf32> to vector<16x1xf32>
    %13 = arith.mulf %9, %9 : vector<16x128xf32>
    %cst_6 = arith.constant dense<0.000000e+00> : vector<16xf32>
    %14 = vector.multi_reduction <add>, %13, %cst_6 [1] : vector<16x128xf32> to vector<16xf32>
    %15 = vector.shape_cast %14 : vector<16xf32> to vector<16x1xf32>
    %16 = arith.mulf %12, %8 : vector<16x1xf32>
    %cst_7 = arith.constant 9.99999996E-13 : f32
    %17 = vector.broadcast %cst_7 : f32 to vector<16x1xf32>
    %18 = arith.maximumf %15, %17 : vector<16x1xf32>
    %19 = math.rsqrt %18 : vector<16x1xf32>
    %20 = arith.mulf %16, %19 : vector<16x1xf32>
    %cst_8 = arith.constant 1.000000e+00 : f32
    %21 = vector.broadcast %cst_8 : f32 to vector<16x1xf32>
    %c0_9 = arith.constant 0 : index
    %c0_10 = arith.constant 0 : index
    %22 = vector.load %arg3[%c0_9, %c0_10] : memref<16x512xf32, #tpu.memory_space<vmem>>, vector<16x128xf32>
    %23 = arith.mulf %0, %22 : vector<16x128xf32>
    %cst_11 = arith.constant dense<0.000000e+00> : vector<16xf32>
    %24 = vector.multi_reduction <add>, %23, %cst_11 [1] : vector<16x128xf32> to vector<16xf32>
    %25 = vector.shape_cast %24 : vector<16xf32> to vector<16x1xf32>
    %26 = arith.mulf %22, %22 : vector<16x128xf32>
    %cst_12 = arith.constant dense<0.000000e+00> : vector<16xf32>
    %27 = vector.multi_reduction <add>, %26, %cst_12 [1] : vector<16x128xf32> to vector<16xf32>
    %28 = vector.shape_cast %27 : vector<16xf32> to vector<16x1xf32>
    %29 = arith.mulf %25, %8 : vector<16x1xf32>
    %cst_13 = arith.constant 9.99999996E-13 : f32
    %30 = vector.broadcast %cst_13 : f32 to vector<16x1xf32>
    %31 = arith.maximumf %28, %30 : vector<16x1xf32>
    %32 = math.rsqrt %31 : vector<16x1xf32>
    %33 = arith.mulf %29, %32 : vector<16x1xf32>
    %34 = arith.subf %33, %20 : vector<16x1xf32>
    %35 = math.exp %34 : vector<16x1xf32>
    %36 = arith.addf %21, %35 : vector<16x1xf32>
    %c0_14 = arith.constant 0 : index
    %c128 = arith.constant 128 : index
    %37 = vector.load %arg3[%c0_14, %c128] : memref<16x512xf32, #tpu.memory_space<vmem>>, vector<16x128xf32>
    %38 = arith.mulf %0, %37 : vector<16x128xf32>
    %cst_15 = arith.constant dense<0.000000e+00> : vector<16xf32>
    %39 = vector.multi_reduction <add>, %38, %cst_15 [1] : vector<16x128xf32> to vector<16xf32>
    %40 = vector.shape_cast %39 : vector<16xf32> to vector<16x1xf32>
    %41 = arith.mulf %37, %37 : vector<16x128xf32>
    %cst_16 = arith.constant dense<0.000000e+00> : vector<16xf32>
    %42 = vector.multi_reduction <add>, %41, %cst_16 [1] : vector<16x128xf32> to vector<16xf32>
    %43 = vector.shape_cast %42 : vector<16xf32> to vector<16x1xf32>
    %44 = arith.mulf %40, %8 : vector<16x1xf32>
    %cst_17 = arith.constant 9.99999996E-13 : f32
    %45 = vector.broadcast %cst_17 : f32 to vector<16x1xf32>
    %46 = arith.maximumf %43, %45 : vector<16x1xf32>
    %47 = math.rsqrt %46 : vector<16x1xf32>
    %48 = arith.mulf %44, %47 : vector<16x1xf32>
    %49 = arith.subf %48, %20 : vector<16x1xf32>
    %50 = math.exp %49 : vector<16x1xf32>
    %51 = arith.addf %36, %50 : vector<16x1xf32>
    %c0_18 = arith.constant 0 : index
    %c256 = arith.constant 256 : index
    %52 = vector.load %arg3[%c0_18, %c256] : memref<16x512xf32, #tpu.memory_space<vmem>>, vector<16x128xf32>
    %53 = arith.mulf %0, %52 : vector<16x128xf32>
    %cst_19 = arith.constant dense<0.000000e+00> : vector<16xf32>
    %54 = vector.multi_reduction <add>, %53, %cst_19 [1] : vector<16x128xf32> to vector<16xf32>
    %55 = vector.shape_cast %54 : vector<16xf32> to vector<16x1xf32>
    %56 = arith.mulf %52, %52 : vector<16x128xf32>
    %cst_20 = arith.constant dense<0.000000e+00> : vector<16xf32>
    %57 = vector.multi_reduction <add>, %56, %cst_20 [1] : vector<16x128xf32> to vector<16xf32>
    %58 = vector.shape_cast %57 : vector<16xf32> to vector<16x1xf32>
    %59 = arith.mulf %55, %8 : vector<16x1xf32>
    %cst_21 = arith.constant 9.99999996E-13 : f32
    %60 = vector.broadcast %cst_21 : f32 to vector<16x1xf32>
    %61 = arith.maximumf %58, %60 : vector<16x1xf32>
    %62 = math.rsqrt %61 : vector<16x1xf32>
    %63 = arith.mulf %59, %62 : vector<16x1xf32>
    %64 = arith.subf %63, %20 : vector<16x1xf32>
    %65 = math.exp %64 : vector<16x1xf32>
    %66 = arith.addf %51, %65 : vector<16x1xf32>
    %c0_22 = arith.constant 0 : index
    %c384 = arith.constant 384 : index
    %67 = vector.load %arg3[%c0_22, %c384] : memref<16x512xf32, #tpu.memory_space<vmem>>, vector<16x128xf32>
    %68 = arith.mulf %0, %67 : vector<16x128xf32>
    %cst_23 = arith.constant dense<0.000000e+00> : vector<16xf32>
    %69 = vector.multi_reduction <add>, %68, %cst_23 [1] : vector<16x128xf32> to vector<16xf32>
    %70 = vector.shape_cast %69 : vector<16xf32> to vector<16x1xf32>
    %71 = arith.mulf %67, %67 : vector<16x128xf32>
    %cst_24 = arith.constant dense<0.000000e+00> : vector<16xf32>
    %72 = vector.multi_reduction <add>, %71, %cst_24 [1] : vector<16x128xf32> to vector<16xf32>
    %73 = vector.shape_cast %72 : vector<16xf32> to vector<16x1xf32>
    %74 = arith.mulf %70, %8 : vector<16x1xf32>
    %cst_25 = arith.constant 9.99999996E-13 : f32
    %75 = vector.broadcast %cst_25 : f32 to vector<16x1xf32>
    %76 = arith.maximumf %73, %75 : vector<16x1xf32>
    %77 = math.rsqrt %76 : vector<16x1xf32>
    %78 = arith.mulf %74, %77 : vector<16x1xf32>
    %79 = arith.subf %78, %20 : vector<16x1xf32>
    %80 = math.exp %79 : vector<16x1xf32>
    %81 = arith.addf %66, %80 : vector<16x1xf32>
    %82 = math.log %81 : vector<16x1xf32>
    %c16_i32 = arith.constant 16 : i32
    %83 = arith.muli %arg0, %c16_i32 : i32
    %84 = tpu.iota {dimensions = array<i32: 0>} : vector<16x1xi32>
    %85 = vector.broadcast %83 : i32 to vector<16x1xi32>
    %86 = arith.addi %85, %84 : vector<16x1xi32>
    %c12_i32 = arith.constant 12 : i32
    %87 = vector.broadcast %c12_i32 : i32 to vector<16x1xi32>
    %88 = arith.cmpi slt, %86, %87 : vector<16x1xi32>
    %cst_26 = arith.constant 0.000000e+00 : f32
    %89 = vector.broadcast %cst_26 : f32 to vector<16x1xf32>
    %90 = arith.select %88, %82, %89 : vector<16x1xi1>, vector<16x1xf32>
    %91 = vector.shape_cast %90 : vector<16x1xf32> to vector<1x16x1xf32>
    %cst_27 = arith.constant dense<0.000000e+00> : vector<1xf32>
    %92 = vector.multi_reduction <add>, %91, %cst_27 [1, 2] : vector<1x16x1xf32> to vector<1xf32>
    %93 = vector.shape_cast %92 : vector<1xf32> to vector<1x1x1xf32>
    %94 = vector.extract %93[0, 0, 0] : f32 from vector<1x1x1xf32>
    %95 = tpu.iota {dimensions = array<i32: 1>} : vector<1x8x128xi32>
    %96 = tpu.iota {dimensions = array<i32: 2>} : vector<1x8x128xi32>
    %c0_i32 = arith.constant 0 : i32
    %97 = vector.broadcast %c0_i32 : i32 to vector<1x8x128xi32>
    %98 = arith.cmpi eq, %95, %97 : vector<1x8x128xi32>
    %c0_i32_28 = arith.constant 0 : i32
    %99 = vector.broadcast %c0_i32_28 : i32 to vector<1x8x128xi32>
    %100 = arith.cmpi eq, %96, %99 : vector<1x8x128xi32>
    %101 = arith.andi %98, %100 : vector<1x8x128xi1>
    %cst_29 = arith.constant 0.000000e+00 : f32
    %102 = vector.broadcast %94 : f32 to vector<1x8x128xf32>
    %103 = vector.broadcast %cst_29 : f32 to vector<1x8x128xf32>
    %104 = arith.select %101, %102, %103 : vector<1x8x128xi1>, vector<1x8x128xf32>
    %c0_30 = arith.constant 0 : index
    %c0_31 = arith.constant 0 : index
    %c0_32 = arith.constant 0 : index
    %105 = vector.load %arg4[%c0_30, %c0_31, %c0_32] : memref<1x8x128xf32, #tpu.memory_space<vmem>>, vector<1x8x128xf32>
    tpu.vector_store %arg4[%c0_30, %c0_31, %c0_32], %104 {strides = array<i32>} : memref<1x8x128xf32, #tpu.memory_space<vmem>>, vector<1x8x128xf32>,
    return
  }
  func.func @transform_0(%arg0: i32) -> (i32, i32) {
    %c0_i32 = arith.constant 0 : i32
    %c0_i32_0 = arith.constant 0 : i32
    return %arg0, %c0_i32 : i32, i32
  }
  func.func @transform_1(%arg0: i32) -> (i32, i32) {
    %c0_i32 = arith.constant 0 : i32
    %c0_i32_0 = arith.constant 0 : i32
    return %arg0, %c0_i32 : i32, i32
  }
  func.func @transform_2(%arg0: i32) -> (i32, i32) {
    %c0_i32 = arith.constant 0 : i32
    %c0_i32_0 = arith.constant 0 : i32
    return %arg0, %c0_i32 : i32, i32
  }
  func.func @transform_3(%arg0: i32) -> (i32, i32, i32) {
    %c0_i32 = arith.constant 0 : i32
    %c0_i32_0 = arith.constant 0 : i32
    %c0_i32_1 = arith.constant 0 : i32
    return %arg0, %c0_i32, %c0_i32_0 : i32, i32, i32
  }
}

</mosaic_0001>

<llo_original>
// kernel: tpu_custom_call.1
$region0: #{tpu_custom_call.1}
  #allocation0 [shape = 'u32[]', space=smem, size = 0x4, offset = 0x4, fixed_abs, tag = 'smem constant byte address 0x4 - core index']
  #allocation1 [shape = 'u32[72,128]{1,0:T(1,128)}', space=vmem, size = 0x9000, scoped, tag = 'internal scratch']
  %s0 = inlined_call_operand.hbm [shape: f32[12,128], index: 0, kind: input, shape index: {}]
  %s1 = inlined_call_operand.hbm [shape: f32[12,128], index: 1, kind: input, shape index: {}]
  %s2 = inlined_call_operand.hbm [shape: f32[12,512], index: 2, kind: input, shape index: {}]
  %s3 = inlined_call_operand.hbm [shape: f32[1,8,128], index: 3, kind: output, shape index: {}]
  %s4 = sld [smem:[#allocation0]]
  $region34: #{tpu_custom_call.1} parent=0
    _
  %s6 = ssub.s32 1, %s4
  %s7 = scalar_select 0, %s6, %s4
  $region1: #{tpu_custom_call.1} parent=0
    #allocation2 [shape = 'u8[8192]{0}', space=vmem, size = 0x2000, scoped, tag = 'input window, operand 0, single buffered']
    #allocation3 [shape = 's32[1]{0}', space=sflag, size = 0x4, scoped, tag = 'scoped memory for tpu_custom_call.1']
    #allocation4 [shape = 's32[1]{0}', space=sflag, size = 0x4, scoped, tag = 'scoped memory for tpu_custom_call.1']
    #allocation5 [shape = 'u8[8192]{0}', space=vmem, size = 0x2000, scoped, tag = 'input window, operand 1, single buffered']
    #allocation6 [shape = 's32[1]{0}', space=sflag, size = 0x4, scoped, tag = 'scoped memory for tpu_custom_call.1']
    #allocation7 [shape = 'u8[32768]{0}', space=vmem, size = 0x8000, scoped, tag = 'input window, operand 2, single buffered']
    #allocation8 [shape = 'u8[4096]{0}', space=vmem, size = 0x1000, scoped, tag = 'output window, operand 0, single buffered']
    %8 = vsyncpa [#allocation3], 0
    %9 = vsyncpa [#allocation6], 0
    %10 = vsyncpa [#allocation4], 0
    // Predicated region
    $region2: #{tpu_custom_call.1} parent=1 // pred_check
      _
    $region3: #{tpu_custom_call.1} parent=1 // pred_check_branch
      %12 = sbr.rel (0) target = $region5
    $region4: #{tpu_custom_call.1} parent=1 // pred_region
      %14 = vsyncadd [#allocation3], 0
      %s15 = sshll.u32 %s0, 4
      %s16 = int_to_ptr.hbm [resolvable:$true] %s15
      %s17 = sshll.u32 [#allocation2], 4
      %s18 = int_to_ptr.vmem [resolvable:$true] %s17
      %23 = dma.hbm_to_vmem [thread:$0]  %s16, 256, %s18, [#allocation3], 128, 128, 8
    $region5: #{tpu_custom_call.1} parent=1 // pred_fallthru
      _
    // Predicated region
    $region6: #{tpu_custom_call.1} parent=1 // pred_check
      _
    $region7: #{tpu_custom_call.1} parent=1 // pred_check_branch
      %25 = sbr.rel (0) target = $region9
    $region8: #{tpu_custom_call.1} parent=1 // pred_region
      %27 = vsyncadd [#allocation6], 0
      %s28 = sshll.u32 %s1, 4
      %s29 = int_to_ptr.hbm [resolvable:$true] %s28
      %s30 = sshll.u32 [#allocation5], 4
      %s31 = int_to_ptr.vmem [resolvable:$true] %s30
      %36 = dma.hbm_to_vmem [thread:$0]  %s29, 256, %s31, [#allocation6], 128, 128, 8
    $region9: #{tpu_custom_call.1} parent=1 // pred_fallthru
      _
    // Predicated region
    $region10: #{tpu_custom_call.1} parent=1 // pred_check
      _
    $region11: #{tpu_custom_call.1} parent=1 // pred_check_branch
      %38 = sbr.rel (0) target = $region13
    $region12: #{tpu_custom_call.1} parent=1 // pred_region
      %40 = vsyncadd [#allocation6], 0
      %s41 = sshll.u32 %s2, 4
      %s42 = int_to_ptr.hbm [resolvable:$true] %s41
      %s43 = sshll.u32 [#allocation7], 4
      %s44 = int_to_ptr.vmem [resolvable:$true] %s43
      %49 = dma.hbm_to_vmem [thread:$0]  %s42, 1024, %s44, [#allocation6], 512, 512, 32
    $region13: #{tpu_custom_call.1} parent=1 // pred_fallthru
      _
    // Predicated region
    $region14: #{tpu_custom_call.1} parent=1 // pred_check
      _
    $region15: #{tpu_custom_call.1} parent=1 // pred_check_branch
      %51 = sbr.rel (0) target = $region17
    $region16: #{tpu_custom_call.1} parent=1 // pred_region
      %53 = dma.done [#allocation3], 256
    $region17: #{tpu_custom_call.1} parent=1 // pred_fallthru
      _
    // Predicated region
    $region18: #{tpu_custom_call.1} parent=1 // pred_check
      _
    $region19: #{tpu_custom_call.1} parent=1 // pred_check_branch
      %55 = sbr.rel (0) target = $region21
    $region20: #{tpu_custom_call.1} parent=1 // pred_region
      %57 = dma.done [#allocation6], 256
    $region21: #{tpu_custom_call.1} parent=1 // pred_fallthru
      _
    // Predicated region
    $region22: #{tpu_custom_call.1} parent=1 // pred_check
      _
    $region23: #{tpu_custom_call.1} parent=1 // pred_check_branch
      %59 = sbr.rel (0) target = $region25
    $region24: #{tpu_custom_call.1} parent=1 // pred_region
      %61 = dma.done [#allocation6], 1024
    $region25: #{tpu_custom_call.1} parent=1 // pred_fallthru
      _
    %v62 = vld [vmem:[#allocation2] sm:$0xff]
    %v63 = vld [vmem:[#allocation2 + $0x8] sm:$0xff]
    %v64 = vmul.f32 %v62, %v62
    %v65 = vmul.f32 %v63, %v63
    %66 = vadd.xlane.f32.xlu0 %v64
    %v67 = vpop.xlane.xlu0 %66
    %68 = vadd.xlane.f32.xlu0 %v65
    %v69 = vpop.xlane.xlu0 %68
    %v70 = vmax.f32 %v67, 1e-12
    %v71 = vmax.f32 %v69, 1e-12
    %v72 = vrsqrt.pop %v70
    %v73 = vmul.f32 %v72, %v70
    %v74 = vmul.f32 %v73, %v72
    %v75 = vmul.f32 0.5, %v74
    %v76 = vsub.f32 1.5, %v75
    %v77 = vmul.f32 %v72, %v76
    %vm78 = vweird.f32 %v70
    %vm79 = vweird.f32 %v72
    %vm80 = vmor %vm78, %vm79
    %v81 = vsel %vm80, %v72, %v77
    %v82 = vrsqrt.pop %v71
    %v83 = vmul.f32 %v82, %v71
    %v84 = vmul.f32 %v83, %v82
    %v85 = vmul.f32 0.5, %v84
    %v86 = vsub.f32 1.5, %v85
    %v87 = vmul.f32 %v82, %v86
    %vm88 = vweird.f32 %v71
    %vm89 = vweird.f32 %v82
    %vm90 = vmor %vm88, %vm89
    %v91 = vsel %vm90, %v82, %v87
    %v92 = vmul.f32 %v81, 10.0
    %v93 = vmul.f32 %v91, 10.0
    %v94 = vld [vmem:[#allocation5] sm:$0xff]
    %v95 = vld [vmem:[#allocation5 + $0x8] sm:$0xff]
    %v96 = vmul.f32 %v62, %v94
    %v97 = vmul.f32 %v63, %v95
    %98 = vadd.xlane.f32.xlu0 %v96
    %v99 = vpop.xlane.xlu0 %98
    %100 = vadd.xlane.f32.xlu0 %v97
    %v101 = vpop.xlane.xlu0 %100
    %v102 = vmul.f32 %v94, %v94
    %v103 = vmul.f32 %v95, %v95
    %104 = vadd.xlane.f32.xlu0 %v102
    %v105 = vpop.xlane.xlu0 %104
    %106 = vadd.xlane.f32.xlu0 %v103
    %v107 = vpop.xlane.xlu0 %106
    %v108 = vmul.f32 %v99, %v92
    %v109 = vmul.f32 %v101, %v93
    %v110 = vmax.f32 %v105, 1e-12
    %v111 = vmax.f32 %v107, 1e-12
    %v112 = vrsqrt.pop %v110
    %v113 = vmul.f32 %v112, %v110
    %v114 = vmul.f32 %v113, %v112
    %v115 = vmul.f32 0.5, %v114
    %v116 = vsub.f32 1.5, %v115
    %v117 = vmul.f32 %v112, %v116
    %vm118 = vweird.f32 %v110
    %vm119 = vweird.f32 %v112
    %vm120 = vmor %vm118, %vm119
    %v121 = vsel %vm120, %v112, %v117
    %v122 = vrsqrt.pop %v111
    %v123 = vmul.f32 %v122, %v111
    %v124 = vmul.f32 %v123, %v122
    %v125 = vmul.f32 0.5, %v124
    %v126 = vsub.f32 1.5, %v125
    %v127 = vmul.f32 %v122, %v126
    %vm128 = vweird.f32 %v111
    %vm129 = vweird.f32 %v122
    %vm130 = vmor %vm128, %vm129
    %v131 = vsel %vm130, %v122, %v127
    %v132 = vmul.f32 %v108, %v121
    %v133 = vmul.f32 %v109, %v131
    %v134 = vld [vmem:[#allocation7] sm:$0xff]
    %v135 = vld [vmem:[#allocation7 + $0x20] sm:$0xff]
    %v136 = vmul.f32 %v62, %v134
    %v137 = vmul.f32 %v63, %v135
    %138 = vadd.xlane.f32.xlu0 %v136
    %v139 = vpop.xlane.xlu0 %138
    %140 = vadd.xlane.f32.xlu0 %v137
    %v141 = vpop.xlane.xlu0 %140
    %v142 = vmul.f32 %v134, %v134
    %v143 = vmul.f32 %v135, %v135
    %144 = vadd.xlane.f32.xlu0 %v142
    %v145 = vpop.xlane.xlu0 %144
    %146 = vadd.xlane.f32.xlu0 %v143
    %v147 = vpop.xlane.xlu0 %146
    %v148 = vmul.f32 %v139, %v92
    %v149 = vmul.f32 %v141, %v93
    %v150 = vmax.f32 %v145, 1e-12
    %v151 = vmax.f32 %v147, 1e-12
    %v152 = vrsqrt.pop %v150
    %v153 = vmul.f32 %v152, %v150
    %v154 = vmul.f32 %v153, %v152
    %v155 = vmul.f32 0.5, %v154
    %v156 = vsub.f32 1.5, %v155
    %v157 = vmul.f32 %v152, %v156
    %vm158 = vweird.f32 %v150
    %vm159 = vweird.f32 %v152
    %vm160 = vmor %vm158, %vm159
    %v161 = vsel %vm160, %v152, %v157
    %v162 = vrsqrt.pop %v151
    %v163 = vmul.f32 %v162, %v151
    %v164 = vmul.f32 %v163, %v162
    %v165 = vmul.f32 0.5, %v164
    %v166 = vsub.f32 1.5, %v165
    %v167 = vmul.f32 %v162, %v166
    %vm168 = vweird.f32 %v151
    %vm169 = vweird.f32 %v162
    %vm170 = vmor %vm168, %vm169
    %v171 = vsel %vm170, %v162, %v167
    %v172 = vmul.f32 %v148, %v161
    %v173 = vmul.f32 %v149, %v171
    %v174 = vsub.f32 %v172, %v132
    %v175 = vsub.f32 %v173, %v133
    %v176 = vmul.f32 %v174, 1.442695
    %v177 = vpow.pop %v176
    %v178 = vmul.f32 %v175, 1.442695
    %v179 = vpow.pop %v178
    %v180 = vadd.f32 %v177, 1.0
    %v181 = vadd.f32 %v179, 1.0
    %v182 = vld [vmem:[#allocation7 + $0x8] sm:$0xff]
    %v183 = vld [vmem:[#allocation7 + $0x28] sm:$0xff]
    %v184 = vmul.f32 %v62, %v182
    %v185 = vmul.f32 %v63, %v183
    %186 = vadd.xlane.f32.xlu0 %v184
    %v187 = vpop.xlane.xlu0 %186
    %188 = vadd.xlane.f32.xlu0 %v185
    %v189 = vpop.xlane.xlu0 %188
    %v190 = vmul.f32 %v182, %v182
    %v191 = vmul.f32 %v183, %v183
    %192 = vadd.xlane.f32.xlu0 %v190
    %v193 = vpop.xlane.xlu0 %192
    %194 = vadd.xlane.f32.xlu0 %v191
    %v195 = vpop.xlane.xlu0 %194
    %v196 = vmul.f32 %v187, %v92
    %v197 = vmul.f32 %v189, %v93
    %v198 = vmax.f32 %v193, 1e-12
    %v199 = vmax.f32 %v195, 1e-12
    %v200 = vrsqrt.pop %v198
    %v201 = vmul.f32 %v200, %v198
    %v202 = vmul.f32 %v201, %v200
    %v203 = vmul.f32 0.5, %v202
    %v204 = vsub.f32 1.5, %v203
    %v205 = vmul.f32 %v200, %v204
    %vm206 = vweird.f32 %v198
    %vm207 = vweird.f32 %v200
    %vm208 = vmor %vm206, %vm207
    %v209 = vsel %vm208, %v200, %v205
    %v210 = vrsqrt.pop %v199
    %v211 = vmul.f32 %v210, %v199
    %v212 = vmul.f32 %v211, %v210
    %v213 = vmul.f32 0.5, %v212
    %v214 = vsub.f32 1.5, %v213
    %v215 = vmul.f32 %v210, %v214
    %vm216 = vweird.f32 %v199
    %vm217 = vweird.f32 %v210
    %vm218 = vmor %vm216, %vm217
    %v219 = vsel %vm218, %v210, %v215
    %v220 = vmul.f32 %v196, %v209
    %v221 = vmul.f32 %v197, %v219
    %v222 = vsub.f32 %v220, %v132
    %v223 = vsub.f32 %v221, %v133
    %v224 = vmul.f32 %v222, 1.442695
    %v225 = vpow.pop %v224
    %v226 = vmul.f32 %v223, 1.442695
    %v227 = vpow.pop %v226
    %v228 = vadd.f32 %v180, %v225
    %v229 = vadd.f32 %v181, %v227
    %v230 = vld [vmem:[#allocation7 + $0x10] sm:$0xff]
    %v231 = vld [vmem:[#allocation7 + $0x30] sm:$0xff]
    %v232 = vmul.f32 %v62, %v230
    %v233 = vmul.f32 %v63, %v231
    %234 = vadd.xlane.f32.xlu0 %v232
    %v235 = vpop.xlane.xlu0 %234
    %236 = vadd.xlane.f32.xlu0 %v233
    %v237 = vpop.xlane.xlu0 %236
    %v238 = vmul.f32 %v230, %v230
    %v239 = vmul.f32 %v231, %v231
    %240 = vadd.xlane.f32.xlu0 %v238
    %v241 = vpop.xlane.xlu0 %240
    %242 = vadd.xlane.f32.xlu0 %v239
    %v243 = vpop.xlane.xlu0 %242
    %v244 = vmul.f32 %v235, %v92
    %v245 = vmul.f32 %v237, %v93
    %v246 = vmax.f32 %v241, 1e-12
    %v247 = vmax.f32 %v243, 1e-12
    %v248 = vrsqrt.pop %v246
    %v249 = vmul.f32 %v248, %v246
    %v250 = vmul.f32 %v249, %v248
    %v251 = vmul.f32 0.5, %v250
    %v252 = vsub.f32 1.5, %v251
    %v253 = vmul.f32 %v248, %v252
    %vm254 = vweird.f32 %v246
    %vm255 = vweird.f32 %v248
    %vm256 = vmor %vm254, %vm255
    %v257 = vsel %vm256, %v248, %v253
    %v258 = vrsqrt.pop %v247
    %v259 = vmul.f32 %v258, %v247
    %v260 = vmul.f32 %v259, %v258
    %v261 = vmul.f32 0.5, %v260
    %v262 = vsub.f32 1.5, %v261
    %v263 = vmul.f32 %v258, %v262
    %vm264 = vweird.f32 %v247
    %vm265 = vweird.f32 %v258
    %vm266 = vmor %vm264, %vm265
    %v267 = vsel %vm266, %v258, %v263
    %v268 = vmul.f32 %v244, %v257
    %v269 = vmul.f32 %v245, %v267
    %v270 = vsub.f32 %v268, %v132
    %v271 = vsub.f32 %v269, %v133
    %v272 = vmul.f32 %v270, 1.442695
    %v273 = vpow.pop %v272
    %v274 = vmul.f32 %v271, 1.442695
    %v275 = vpow.pop %v274
    %v276 = vadd.f32 %v228, %v273
    %v277 = vadd.f32 %v229, %v275
    %v278 = vld [vmem:[#allocation7 + $0x18] sm:$0xff]
    %v279 = vld [vmem:[#allocation7 + $0x38] sm:$0xff]
    %v280 = vmul.f32 %v62, %v278
    %v281 = vmul.f32 %v63, %v279
    %282 = vadd.xlane.f32.xlu0 %v280
    %v283 = vpop.xlane.xlu0 %282
    %284 = vadd.xlane.f32.xlu0 %v281
    %v285 = vpop.xlane.xlu0 %284
    %v286 = vmul.f32 %v278, %v278
    %v287 = vmul.f32 %v279, %v279
    %288 = vadd.xlane.f32.xlu0 %v286
    %v289 = vpop.xlane.xlu0 %288
    %290 = vadd.xlane.f32.xlu0 %v287
    %v291 = vpop.xlane.xlu0 %290
    %v292 = vmul.f32 %v283, %v92
    %v293 = vmul.f32 %v285, %v93
    %v294 = vmax.f32 %v289, 1e-12
    %v295 = vmax.f32 %v291, 1e-12
    %v296 = vrsqrt.pop %v294
    %v297 = vmul.f32 %v296, %v294
    %v298 = vmul.f32 %v297, %v296
    %v299 = vmul.f32 0.5, %v298
    %v300 = vsub.f32 1.5, %v299
    %v301 = vmul.f32 %v296, %v300
    %vm302 = vweird.f32 %v294
    %vm303 = vweird.f32 %v296
    %vm304 = vmor %vm302, %vm303
    %v305 = vsel %vm304, %v296, %v301
    %v306 = vrsqrt.pop %v295
    %v307 = vmul.f32 %v306, %v295
    %v308 = vmul.f32 %v307, %v306
    %v309 = vmul.f32 0.5, %v308
    %v310 = vsub.f32 1.5, %v309
    %v311 = vmul.f32 %v306, %v310
    %vm312 = vweird.f32 %v295
    %vm313 = vweird.f32 %v306
    %vm314 = vmor %vm312, %vm313
    %v315 = vsel %vm314, %v306, %v311
    %v316 = vmul.f32 %v292, %v305
    %v317 = vmul.f32 %v293, %v315
    %v318 = vsub.f32 %v316, %v132
    %v319 = vsub.f32 %v317, %v133
    %v320 = vmul.f32 %v318, 1.442695
    %v321 = vpow.pop %v320
    %v322 = vmul.f32 %v319, 1.442695
    %v323 = vpow.pop %v322
    %v324 = vadd.f32 %v276, %v321
    %v325 = vadd.f32 %v277, %v323
    %v326 = vlog2.pop %v324
    %v327 = vmul.f32 %v326, 0.6931472
    %v328 = vlog2.pop %v325
    %v329 = vmul.f32 %v328, 0.6931472
    %s330 = smul.u32 0, 16
    %v331 = vlaneseq
    %v332 = vshrl.u32 %v331, 7
    %v333 = vadd.s32 %v332, 8
    %v334 = vstv %s330
    %v335 = vadd.s32 %v334, %v332
    %v336 = vadd.s32 %v334, %v333
    %vm337 = vcmp.lt.s32.totalorder %v335, 12
    %vm338 = vcmp.lt.s32.totalorder %v336, 12
    %v339 = vsel %vm337, %v327, 0.0
    %v340 = vsel %vm338, %v329, 0.0
    %vm341 = vcmask 7168
    %v342 = vsel %vm341, %v339, 0.0
    %v343 = vsel %vm341, %v340, 0.0
    %v344 = vadd.f32 %v342, %v343
    %345 = vadd.xlane.f32.xlu0 %v344
    %v346 = vpop.xlane.xlu0 %345
    %v347 = vrot.slane %v346, 4
    %v348 = vadd.f32 %v346, %v347
    %v349 = vrot.slane %v348, 2
    %v350 = vadd.f32 %v348, %v349
    %v351 = vrot.slane %v350, 1
    %v352 = vadd.f32 %v350, %v351
    %s353 = vtos %v352
    %v354 = vlaneseq
    %v355 = vand.u32 %v354, 127
    %vm356 = vcmp.eq.s32.totalorder %v332, 0
    %vm357 = vcmp.eq.s32.totalorder %v355, 0
    %vm358 = vmand %vm356, %vm357
    %v359 = vstv %s353
    %v360 = vsel %vm358, %v359, 0.0
    %361 = vst [vmem:[#allocation8] sm:$0xff] %v360
    // Predicated region
    $region26: #{tpu_custom_call.1} parent=1 // pred_check
      _
    $region27: #{tpu_custom_call.1} parent=1 // pred_check_branch
      %363 = sbr.rel (0) target = $region29
    $region28: #{tpu_custom_call.1} parent=1 // pred_region
      %365 = vsyncadd [#allocation4], 0
      %s367 = sshll.u32 [#allocation8], 4
      %s368 = int_to_ptr.vmem [resolvable:$true] %s367
      %s369 = sshll.u32 %s3, 4
      %s370 = int_to_ptr.hbm [resolvable:$true] %s369
      %372 = dma.vmem_to_hbm [thread:$0]  %s368, 128, %s370, [#allocation4]
    $region29: #{tpu_custom_call.1} parent=1 // pred_fallthru
      _
    // Predicated region
    $region30: #{tpu_custom_call.1} parent=1 // pred_check
      _
    $region31: #{tpu_custom_call.1} parent=1 // pred_check_branch
      %374 = sbr.rel (0) target = $region33
    $region32: #{tpu_custom_call.1} parent=1 // pred_region
      %376 = dma.done [#allocation4], 128
    $region33: #{tpu_custom_call.1} parent=1 // pred_fallthru
      _
    %377 = vsyncpa [#allocation3], 1
    %378 = vsyncpa [#allocation6], 1
    %379 = vsyncpa [#allocation4], 1

</llo_original>
